<compile_context>
chip_gen: v7x
topology: tpu7x:2x2x1
jax: 0.10.0
libtpu: 0.0.40
codegen_flags: <defaults>
</compile_context>

<pallas_src>
import jax
import jax.numpy as jnp
from jax.experimental import pallas as pl
from jax.experimental.pallas import tpu as pltpu


def _round_up(n, m):
    return ((n + m - 1) // m) * m


def mlp_kernel(x_ref, w1_ref, b1_ref, w2_ref, b2_ref, w34_ref, b34_ref, o_ref):
    compute_dtype = w1_ref.dtype
    # In-kernel cast (VPU): x streams from HBM exactly once, as fp32.
    x = x_ref[...].astype(compute_dtype)                              # [TB, D]

    # fc1 + ReLU (dropout1 is identity in eval mode).
    h1 = jnp.dot(x, w1_ref[...], preferred_element_type=jnp.float32) + b1_ref[...]
    h1 = jnp.maximum(h1, 0.0).astype(compute_dtype)                   # [TB, 128]

    # fc2 + ReLU (dropout2 is identity in eval mode).
    h2 = jnp.dot(h1, w2_ref[...], preferred_element_type=jnp.float32) + b2_ref[...]
    h2 = jnp.maximum(h2, 0.0)                                         # [TB, 64] fp32

    # fc3+fc4 fused into a single rank-1 projection (fusion done in wrapper):
    # VPU multiply + cross-lane reduce instead of an N=1 MXU matmul.
    out_row = jnp.sum(h2 * w34_ref[...], axis=-1)                     # [TB]
    # b34 is a scalar read from SMEM; broadcast-add is free on the VPU.
    o_ref[...] = (out_row[None, :] + b34_ref[0, 0]).astype(o_ref.dtype)  # (1, TB)


def mlp_forward(x, params, *, block_b=1024, compute_dtype=jnp.bfloat16):
    """x: [B, D] float32.  params: dict of (w, b) per layer, w in [in, out]."""
    B, D = x.shape
    w1, b1 = params["fc1"]
    w2, b2 = params["fc2"]
    w3, b3 = params["fc3"]
    w4, b4 = params["fc4"]

    # Algebraic fusion of fc3/fc4 (exact in exact arithmetic; valid only
    # because there is NO activation between fc3 and fc4):
    #   (h @ w3 + b3) @ w4 + b4 == h @ (w3 @ w4) + (b3 @ w4 + b4)
    w34 = (w3 @ w4).T                      # (1, 64) fp32, VPU operand
    b34 = b3 @ w4 + b4                     # (1, 1) fp32 scalar -> SMEM

    # bf16 (or fp32) matmul weights; biases / epilogue stay fp32.
    w1c = w1.astype(compute_dtype)
    w2c = w2.astype(compute_dtype)

    # Batch tile: large enough to amortize per-grid-step overhead and MXU
    # weight-load fill/drain, but never larger than (rounded-up) B so tiny
    # batches don't burn compute on padded rows.  Keep it a multiple of 8.
    block_b = max(8, min(_round_up(B, 8), _round_up(block_b, 8)))
    num_tiles = pl.cdiv(B, block_b)

    itemsize = jnp.dtype(compute_dtype).itemsize
    cost = pl.CostEstimate(
        flops=2 * B * (D * 128 + 128 * 64 + 64),
        transcendentals=0,
        bytes_accessed=(B * D * 4                      # fp32 x stream
                        + num_tiles * block_b * 4      # fp32 output
                        + (D * 128 + 128 * 64) * itemsize
                        + (128 + 64 + 64 + 1) * 4),    # biases + fused w34/b34
    )

    def resident(a):
        # Constant index_map -> operand stays resident in VMEM across steps.
        return pl.BlockSpec(a.shape, lambda i: (0, 0))

    out = pl.pallas_call(
        mlp_kernel,
        out_shape=jax.ShapeDtypeStruct((num_tiles, block_b), jnp.float32),
        grid=(num_tiles,),
        in_specs=[
            # x streams in (block_b, D) fp32 tiles; the final (possibly
            # partial) block is padded by Pallas with undefined rows, whose
            # outputs are discarded by the [:B] slice below.
            pl.BlockSpec((block_b, D), lambda i: (i, 0)),
            resident(w1c), resident(b1),
            resident(w2c), resident(b2),
            resident(w34),
            # Fused fc3/fc4 bias as a (1,1) scalar in SMEM.
            pl.BlockSpec(memory_space=pltpu.MemorySpace.SMEM),
        ],
        # Lane-dense output: one (1, block_b) row per batch tile.
        out_specs=pl.BlockSpec((1, block_b), lambda i: (i, 0)),
        compiler_params=pltpu.CompilerParams(
            dimension_semantics=("parallel",)),
        cost_estimate=cost,
    )(x, w1c, b1, w2c, b2, w34, b34)

    # Free layout plumbing back to the PyTorch-shaped (B, 1) output.
    return out.reshape(num_tiles * block_b, 1)[:B]


def init_params(input_size, key):
    """Deterministic PyTorch-style Linear init: U(-1/sqrt(fan_in), 1/sqrt(fan_in))."""
    layer_dims = {"fc1": (input_size, 128), "fc2": (128, 64),
                  "fc3": (64, 32), "fc4": (32, 1)}
    params = {}
    for name, (fan_in, fan_out) in layer_dims.items():
        key, kw, kb = jax.random.split(key, 3)
        bound = 1.0 / jnp.sqrt(jnp.float32(fan_in))
        w = jax.random.uniform(kw, (fan_in, fan_out), jnp.float32, -bound, bound)
        b = jax.random.uniform(kb, (1, fan_out), jnp.float32, -bound, bound)
        params[name] = (w, b)
    return params


def _ref(x, p):
    h = jnp.maximum(x @ p["fc1"][0] + p["fc1"][1], 0.0)
    h = jnp.maximum(h @ p["fc2"][0] + p["fc2"][1], 0.0)
    h = h @ p["fc3"][0] + p["fc3"][1]
    return h @ p["fc4"][0] + p["fc4"][1]


if __name__ == "__main__":
    key = jax.random.PRNGKey(0)
    key, kx, kx2 = jax.random.split(key, 3)

    batch = 8
    input_size = 32
    x = jax.random.normal(kx, (batch, input_size), jnp.float32)
    params = init_params(input_size, key)
    expected = _ref(x, params)

    # Default bf16 compute path (fp32 accumulate, fp32 bias/ReLU epilogue).
    out = mlp_forward(x, params)
    jax.block_until_ready(out)
    assert out.shape == (batch, 1)
    assert jnp.allclose(out, expected, atol=5e-2, rtol=5e-2), (
        float(jnp.max(jnp.abs(out - expected))))

    # fp32-exact compute path.
    out_f32 = mlp_forward(x, params, compute_dtype=jnp.float32)
    jax.block_until_ready(out_f32)
    assert jnp.allclose(out_f32, expected, atol=1e-4, rtol=1e-4), (
        float(jnp.max(jnp.abs(out_f32 - expected))))

    # Multi-tile grid with a partial boundary block and NO wrapper-side pad:
    # num_tiles = 3, last tile has 44 valid rows (rest undefined, discarded).
    big_batch = 300
    x_big = jax.random.normal(kx2, (big_batch, input_size), jnp.float32)
    out_big = mlp_forward(x_big, params, block_b=128, compute_dtype=jnp.float32)
    jax.block_until_ready(out_big)
    expected_big = _ref(x_big, params)
    assert out_big.shape == (big_batch, 1)
    assert jnp.allclose(out_big, expected_big, atol=1e-4, rtol=1e-4), (
        float(jnp.max(jnp.abs(out_big - expected_big))))

    print("KERNEL_OK")
</pallas_src>

<mosaic_0001>
module attributes {stable_mosaic.version = 11 : i64} {
  func.func @mlp_kernel(%arg0: i32, %arg1: memref<8x32xf32, #tpu.memory_space<vmem>>, %arg2: memref<32x128xbf16, #tpu.memory_space<vmem>>, %arg3: memref<1x128xf32, #tpu.memory_space<vmem>>, %arg4: memref<128x64xbf16, #tpu.memory_space<vmem>>, %arg5: memref<1x64xf32, #tpu.memory_space<vmem>>, %arg6: memref<1x64xf32, #tpu.memory_space<vmem>>, %arg7: memref<1x1xf32, #tpu.memory_space<smem>>, %arg8: memref<1x8xf32, #tpu.memory_space<vmem>>) attributes {dimension_semantics = [#tpu.dimension_semantics<parallel>], iteration_bounds = array<i64: 1>, scalar_prefetch = 0 : i64, scratch_operands = 0 : i64, tpu.core_type = #tpu.core_type<tc>, window_params = [{transform_indices = @transform_0, window_bounds = array<i64: 8, 32>}, {pipeline_mode = #tpu.pipeline_mode<synchronous>, transform_indices = @transform_1, window_bounds = array<i64: 32, 128>}, {pipeline_mode = #tpu.pipeline_mode<synchronous>, transform_indices = @transform_2, window_bounds = array<i64: 1, 128>}, {pipeline_mode = #tpu.pipeline_mode<synchronous>, transform_indices = @transform_3, window_bounds = array<i64: 128, 64>}, {pipeline_mode = #tpu.pipeline_mode<synchronous>, transform_indices = @transform_4, window_bounds = array<i64: 1, 64>}, {pipeline_mode = #tpu.pipeline_mode<synchronous>, transform_indices = @transform_5, window_bounds = array<i64: 1, 64>}, {transform_indices = @transform_6, window_bounds = array<i64: 1, 1>}, {transform_indices = @transform_7, window_bounds = array<i64: 1, 8>}]} {
    %c0 = arith.constant 0 : index
    %c0_0 = arith.constant 0 : index
    %0 = vector.load %arg1[%c0, %c0_0] : memref<8x32xf32, #tpu.memory_space<vmem>>, vector<8x32xf32>
    %1 = arith.truncf %0 : vector<8x32xf32> to vector<8x32xbf16>
    %c0_1 = arith.constant 0 : index
    %c0_2 = arith.constant 0 : index
    %2 = vector.load %arg2[%c0_1, %c0_2] : memref<32x128xbf16, #tpu.memory_space<vmem>>, vector<32x128xbf16>
    %cst = arith.constant dense<0.000000e+00> : vector<8x128xf32>
    %3 = tpu.matmul %1, %2, %cst {dimension_numbers = #tpu.dot_dimension_numbers<[1], [0], [0], [1], [0, 0, 1, 1], [], []>} : vector<8x32xbf16>, vector<32x128xbf16>, vector<8x128xf32> -> vector<8x128xf32>
    %c0_3 = arith.constant 0 : index
    %c0_4 = arith.constant 0 : index
    %4 = vector.load %arg3[%c0_3, %c0_4] : memref<1x128xf32, #tpu.memory_space<vmem>>, vector<1x128xf32>
    %5 = vector.broadcast %4 : vector<1x128xf32> to vector<8x128xf32>
    %6 = arith.addf %3, %5 : vector<8x128xf32>
    %cst_5 = arith.constant 0.000000e+00 : f32
    %7 = vector.broadcast %cst_5 : f32 to vector<8x128xf32>
    %8 = arith.maximumf %6, %7 : vector<8x128xf32>
    %9 = arith.truncf %8 : vector<8x128xf32> to vector<8x128xbf16>
    %c0_6 = arith.constant 0 : index
    %c0_7 = arith.constant 0 : index
    %10 = vector.load %arg4[%c0_6, %c0_7] : memref<128x64xbf16, #tpu.memory_space<vmem>>, vector<128x64xbf16>
    %cst_8 = arith.constant dense<0.000000e+00> : vector<8x64xf32>
    %11 = tpu.matmul %9, %10, %cst_8 {dimension_numbers = #tpu.dot_dimension_numbers<[1], [0], [0], [1], [0, 0, 1, 1], [], []>} : vector<8x128xbf16>, vector<128x64xbf16>, vector<8x64xf32> -> vector<8x64xf32>
    %c0_9 = arith.constant 0 : index
    %c0_10 = arith.constant 0 : index
    %12 = vector.load %arg5[%c0_9, %c0_10] : memref<1x64xf32, #tpu.memory_space<vmem>>, vector<1x64xf32>
    %13 = vector.broadcast %12 : vector<1x64xf32> to vector<8x64xf32>
    %14 = arith.addf %11, %13 : vector<8x64xf32>
    %cst_11 = arith.constant 0.000000e+00 : f32
    %15 = vector.broadcast %cst_11 : f32 to vector<8x64xf32>
    %16 = arith.maximumf %14, %15 : vector<8x64xf32>
    %c0_12 = arith.constant 0 : index
    %c0_13 = arith.constant 0 : index
    %17 = vector.load %arg6[%c0_12, %c0_13] : memref<1x64xf32, #tpu.memory_space<vmem>>, vector<1x64xf32>
    %18 = vector.broadcast %17 : vector<1x64xf32> to vector<8x64xf32>
    %19 = arith.mulf %16, %18 : vector<8x64xf32>
    %cst_14 = arith.constant dense<0.000000e+00> : vector<8xf32>
    %20 = vector.multi_reduction <add>, %19, %cst_14 [1] : vector<8x64xf32> to vector<8xf32>
    %21 = vector.shape_cast %20 : vector<8xf32> to vector<1x8xf32>
    %c0_15 = arith.constant 0 : index
    %c0_16 = arith.constant 0 : index
    %22 = memref.load %arg7[%c0_15, %c0_16] : memref<1x1xf32, #tpu.memory_space<smem>>
    %23 = vector.broadcast %22 : f32 to vector<1x8xf32>
    %24 = arith.addf %21, %23 : vector<1x8xf32>
    %c0_17 = arith.constant 0 : index
    %c0_18 = arith.constant 0 : index
    %25 = vector.load %arg8[%c0_17, %c0_18] : memref<1x8xf32, #tpu.memory_space<vmem>>, vector<1x8xf32>
    tpu.vector_store %arg8[%c0_17, %c0_18], %24 {strides = array<i32>} : memref<1x8xf32, #tpu.memory_space<vmem>>, vector<1x8xf32>,
    return
  }
  func.func @transform_0(%arg0: i32) -> (i32, i32) {
    %c0_i32 = arith.constant 0 : i32
    %c0_i32_0 = arith.constant 0 : i32
    return %arg0, %c0_i32 : i32, i32
  }
  func.func @transform_1(%arg0: i32) -> (i32, i32) {
    %c0_i32 = arith.constant 0 : i32
    %c0_i32_0 = arith.constant 0 : i32
    %c0_i32_1 = arith.constant 0 : i32
    return %c0_i32, %c0_i32_0 : i32, i32
  }
  func.func @transform_2(%arg0: i32) -> (i32, i32) {
    %c0_i32 = arith.constant 0 : i32
    %c0_i32_0 = arith.constant 0 : i32
    %c0_i32_1 = arith.constant 0 : i32
    return %c0_i32, %c0_i32_0 : i32, i32
  }
  func.func @transform_3(%arg0: i32) -> (i32, i32) {
    %c0_i32 = arith.constant 0 : i32
    %c0_i32_0 = arith.constant 0 : i32
    %c0_i32_1 = arith.constant 0 : i32
    return %c0_i32, %c0_i32_0 : i32, i32
  }
  func.func @transform_4(%arg0: i32) -> (i32, i32) {
    %c0_i32 = arith.constant 0 : i32
    %c0_i32_0 = arith.constant 0 : i32
    %c0_i32_1 = arith.constant 0 : i32
    return %c0_i32, %c0_i32_0 : i32, i32
  }
  func.func @transform_5(%arg0: i32) -> (i32, i32) {
    %c0_i32 = arith.constant 0 : i32
    %c0_i32_0 = arith.constant 0 : i32
    %c0_i32_1 = arith.constant 0 : i32
    return %c0_i32, %c0_i32_0 : i32, i32
  }
  func.func @transform_6(%arg0: i32) -> (i32, i32) {
    %c0_i32 = arith.constant 0 : i32
    %c0_i32_0 = arith.constant 0 : i32
    %c0_i32_1 = arith.constant 0 : i32
    return %c0_i32, %c0_i32_0 : i32, i32
  }
  func.func @transform_7(%arg0: i32) -> (i32, i32) {
    %c0_i32 = arith.constant 0 : i32
    %c0_i32_0 = arith.constant 0 : i32
    return %arg0, %c0_i32 : i32, i32
  }
}

</mosaic_0001>

<llo_original>
// kernel: tpu_custom_call.1
$region0: #{tpu_custom_call.1}
  #allocation0 [shape = 'u32[]', space=smem, size = 0x4, offset = 0x4, fixed_abs, tag = 'smem constant byte address 0x4 - core index']
  #allocation1 [shape = 'u32[144,128]{1,0:T(1,128)}', space=vmem, size = 0x12000, scoped, tag = 'internal scratch']
  #allocation2 [shape = 'f32[1,1]{1,0:T(1,128)S(6)}', space=smem, size = 0x200, scoped, tag = 'scoped memory for tpu_custom_call.1']
  %s0 = inlined_call_operand.vmem [shape: f32[8,32], index: 0, kind: input, shape index: {}]
  %s1 = inlined_call_operand.vmem [shape: bf16[32,128], index: 1, kind: input, shape index: {}]
  %s2 = inlined_call_operand.vmem [shape: f32[1,128], index: 2, kind: input, shape index: {}]
  %s3 = inlined_call_operand.vmem [shape: bf16[128,64], index: 3, kind: input, shape index: {}]
  %s4 = inlined_call_operand.vmem [shape: f32[1,64], index: 4, kind: input, shape index: {}]
  %s5 = inlined_call_operand.vmem [shape: f32[1,64], index: 5, kind: input, shape index: {}]
  %s6 = inlined_call_operand.<no memory space> [shape: f32[1,1], index: 6, kind: input, shape index: {}]
  %s7 = inlined_call_operand.hbm [shape: f32[1,8], index: 7, kind: output, shape index: {}]
  %s8 = sld [smem:[#allocation0]]
  $region38: #{tpu_custom_call.1} parent=0
    _
  %s10 = ssub.s32 1, %s8
  %s11 = scalar_select 0, %s10, %s8
  %12 = sst [smem:[#allocation2]] %s6
  $region1: #{tpu_custom_call.1} parent=0
    #allocation3 [shape = 'u8[512]{0}', space=vmem, size = 0x400, scoped, tag = 'output window, operand 0, single buffered']
    #allocation4 [shape = 's32[1]{0}', space=sflag, size = 0x4, scoped, tag = 'scoped memory for tpu_custom_call.1']
    %13 = vsyncpa [#allocation4], 0
    // Predicated region
    $region2: #{tpu_custom_call.1} parent=1 // pred_check
      _
    $region3: #{tpu_custom_call.1} parent=1 // pred_check_branch
      %15 = sbr.rel (0) target = $region5
    $region4: #{tpu_custom_call.1} parent=1 // pred_region
      _
    $region5: #{tpu_custom_call.1} parent=1 // pred_fallthru
      _
    // Predicated region
    $region6: #{tpu_custom_call.1} parent=1 // pred_check
      _
    $region7: #{tpu_custom_call.1} parent=1 // pred_check_branch
      %17 = sbr.rel (0) target = $region9
    $region8: #{tpu_custom_call.1} parent=1 // pred_region
      _
    $region9: #{tpu_custom_call.1} parent=1 // pred_fallthru
      _
    // Predicated region
    $region10: #{tpu_custom_call.1} parent=1 // pred_check
      _
    $region11: #{tpu_custom_call.1} parent=1 // pred_check_branch
      %19 = sbr.rel (0) target = $region13
    $region12: #{tpu_custom_call.1} parent=1 // pred_region
      _
    $region13: #{tpu_custom_call.1} parent=1 // pred_fallthru
      _
    // Predicated region
    $region14: #{tpu_custom_call.1} parent=1 // pred_check
      _
    $region15: #{tpu_custom_call.1} parent=1 // pred_check_branch
      %21 = sbr.rel (0) target = $region17
    $region16: #{tpu_custom_call.1} parent=1 // pred_region
      _
    $region17: #{tpu_custom_call.1} parent=1 // pred_fallthru
      _
    // Predicated region
    $region18: #{tpu_custom_call.1} parent=1 // pred_check
      _
    $region19: #{tpu_custom_call.1} parent=1 // pred_check_branch
      %23 = sbr.rel (0) target = $region21
    $region20: #{tpu_custom_call.1} parent=1 // pred_region
      _
    $region21: #{tpu_custom_call.1} parent=1 // pred_fallthru
      _
    // Predicated region
    $region22: #{tpu_custom_call.1} parent=1 // pred_check
      _
    $region23: #{tpu_custom_call.1} parent=1 // pred_check_branch
      %25 = sbr.rel (0) target = $region25
    $region24: #{tpu_custom_call.1} parent=1 // pred_region
      _
    $region25: #{tpu_custom_call.1} parent=1 // pred_fallthru
      _
    // Predicated region
    $region26: #{tpu_custom_call.1} parent=1 // pred_check
      _
    $region27: #{tpu_custom_call.1} parent=1 // pred_check_branch
      %27 = sbr.rel (0) target = $region29
    $region28: #{tpu_custom_call.1} parent=1 // pred_region
      _
    $region29: #{tpu_custom_call.1} parent=1 // pred_fallthru
      _
    %v29 = vld [vmem:[%s0] sm:$0xff]
    %v30 = vpack.c.bf16 %v29, %v29
    %v31 = vld [vmem:[%s1] sm:$0xf]
    %v32 = vld [vmem:[%s1 + $0x4] sm:$0xf]
    %v33 = vld [vmem:[%s1 + $0x8] sm:$0xf]
    %v34 = vld [vmem:[%s1 + $0xc] sm:$0xf]
    %v35 = vld [vmem:[%s2] sm:$0x1]
    %v37 = vlaneseq
    %v38 = vshrl.u32 %v37, 7
    %v39 = vsub.s32 0, %v38
    %v40 = vrot.slane %v35, %v39
    %v46 = vunpack.c.l.b16 %v31
    %v47 = vunpack.c.l.b16 %v32
    %v48 = vunpack.c.l.b16 %v33
    %v49 = vunpack.c.l.b16 %v34
    %v50 = vpack.c.b16 %v47, %v46
    %v51 = vpack.c.b16 %v49, %v48
    %vm54 = vcmask 261120
    %v56 = vsel %vm54, %v30, 0
    %58 = vmatprep.subr.bf16.mxu0 0
    %59 = vmatpush1.bf16.msra.mxu0 %v50
    %60 = vmatprep.subr.bf16.mxu0 0
    %61 = vmatpush1.bf16.msra.mxu0 %v51
    %62 = vmatprep.subr.bf16.mxu0 0
    %63 = vmatpush1.bf16.msra.mxu0 0
    %64 = vmatprep.subr.bf16.mxu0 0
    %65 = vmatpush1.bf16.msra.mxu0 0
    %66 = vmatprep.subr.bf16.mxu0 0
    %67 = vmatpush1.bf16.msra.mxu0 0
    %68 = vmatprep.subr.bf16.mxu0 0
    %69 = vmatpush1.bf16.msra.mxu0 0
    %70 = vmatprep.subr.bf16.mxu0 0
    %71 = vmatpush1.bf16.msra.mxu0 0
    %72 = vmatprep.subr.bf16.mxu0 0
    %73 = vmatpush1.bf16.msra.mxu0 0
    %74 = vmatprep.subr.bf16.mxu0 0
    %75 = vmatpush1.bf16.msra.mxu0 0
    %76 = vmatprep.subr.bf16.mxu0 0
    %77 = vmatpush1.bf16.msra.mxu0 0
    %78 = vmatprep.subr.bf16.mxu0 0
    %79 = vmatpush1.bf16.msra.mxu0 0
    %80 = vmatprep.subr.bf16.mxu0 0
    %81 = vmatpush1.bf16.msra.mxu0 0
    %82 = vmatprep.subr.bf16.mxu0 0
    %83 = vmatpush1.bf16.msra.mxu0 0
    %84 = vmatprep.subr.bf16.mxu0 0
    %85 = vmatpush1.bf16.msra.mxu0 0
    %86 = vmatprep.subr.bf16.mxu0 0
    %87 = vmatpush1.bf16.msra.mxu0 0
    %88 = vmatprep.subr.bf16.mxu0 0
    %89 = vmatpush1.bf16.msra.mxu0 0
    %90 = vmatprep.mubr.bf16.mxu0 0
    %91 = vmatmul.mubr.bf16.gmra.mrb[0].mxu0 %v56
    %v92 = vpop.f32.mrb[0].mxu0
    %v93 = vadd.f32 %v40, %v92
    %v94 = vpop.f32.mrb[0].mxu0
    %v95 = vpop.f32.mrb[0].mxu0
    %v96 = vpop.f32.mrb[0].mxu0
    %97 = vdwg.mxu0
    %v98 = vmax.f32 %v93, 0.0
    %v99 = vpack.c.bf16 %v98, %v98
    %v100 = vld [vmem:[%s3] sm:$0xf]
    %v101 = vld [vmem:[%s3 + $0x4] sm:$0xf]
    %v102 = vld [vmem:[%s3 + $0x8] sm:$0xf]
    %v103 = vld [vmem:[%s3 + $0xc] sm:$0xf]
    %v104 = vld [vmem:[%s3 + $0x10] sm:$0xf]
    %v105 = vld [vmem:[%s3 + $0x14] sm:$0xf]
    %v106 = vld [vmem:[%s3 + $0x18] sm:$0xf]
    %v107 = vld [vmem:[%s3 + $0x1c] sm:$0xf]
    %v108 = vld [vmem:[%s3 + $0x20] sm:$0xf]
    %v109 = vld [vmem:[%s3 + $0x24] sm:$0xf]
    %v110 = vld [vmem:[%s3 + $0x28] sm:$0xf]
    %v111 = vld [vmem:[%s3 + $0x2c] sm:$0xf]
    %v112 = vld [vmem:[%s3 + $0x30] sm:$0xf]
    %v113 = vld [vmem:[%s3 + $0x34] sm:$0xf]
    %v114 = vld [vmem:[%s3 + $0x38] sm:$0xf]
    %v115 = vld [vmem:[%s3 + $0x3c] sm:$0xf]
    %v116 = vld [vmem:[%s4] sm:$0x1]
    %v118 = vlaneseq
    %v119 = vshrl.u32 %v118, 7
    %v120 = vsub.s32 0, %v119
    %v121 = vrot.slane %v116, %v120
    %v139 = vunpack.c.l.b16 %v100
    %v140 = vunpack.c.l.b16 %v101
    %v141 = vunpack.c.l.b16 %v102
    %v142 = vunpack.c.l.b16 %v103
    %v143 = vunpack.c.l.b16 %v104
    %v144 = vunpack.c.l.b16 %v105
    %v145 = vunpack.c.l.b16 %v106
    %v146 = vunpack.c.l.b16 %v107
    %v147 = vunpack.c.l.b16 %v108
    %v148 = vunpack.c.l.b16 %v109
    %v149 = vunpack.c.l.b16 %v110
    %v150 = vunpack.c.l.b16 %v111
    %v151 = vunpack.c.l.b16 %v112
    %v152 = vunpack.c.l.b16 %v113
    %v153 = vunpack.c.l.b16 %v114
    %v154 = vunpack.c.l.b16 %v115
    %v155 = vpack.c.b16 %v140, %v139
    %v156 = vpack.c.b16 %v142, %v141
    %v157 = vpack.c.b16 %v144, %v143
    %v158 = vpack.c.b16 %v146, %v145
    %v159 = vpack.c.b16 %v148, %v147
    %v160 = vpack.c.b16 %v150, %v149
    %v161 = vpack.c.b16 %v152, %v151
    %v162 = vpack.c.b16 %v154, %v153
    %171 = vmatprep.subr.bf16.mxu0 0
    %172 = vmatpush1.bf16.msra.mxu0 %v155
    %173 = vmatprep.subr.bf16.mxu0 0
    %174 = vmatpush1.bf16.msra.mxu0 %v156
    %175 = vmatprep.subr.bf16.mxu0 0
    %176 = vmatpush1.bf16.msra.mxu0 %v157
    %177 = vmatprep.subr.bf16.mxu0 0
    %178 = vmatpush1.bf16.msra.mxu0 %v158
    %179 = vmatprep.subr.bf16.mxu0 0
    %180 = vmatpush1.bf16.msra.mxu0 %v159
    %181 = vmatprep.subr.bf16.mxu0 0
    %182 = vmatpush1.bf16.msra.mxu0 %v160
    %183 = vmatprep.subr.bf16.mxu0 0
    %184 = vmatpush1.bf16.msra.mxu0 %v161
    %185 = vmatprep.subr.bf16.mxu0 0
    %186 = vmatpush1.bf16.msra.mxu0 %v162
    %187 = vmatprep.subr.bf16.mxu0 0
    %188 = vmatpush1.bf16.msra.mxu0 0
    %189 = vmatprep.subr.bf16.mxu0 0
    %190 = vmatpush1.bf16.msra.mxu0 0
    %191 = vmatprep.subr.bf16.mxu0 0
    %192 = vmatpush1.bf16.msra.mxu0 0
    %193 = vmatprep.subr.bf16.mxu0 0
    %194 = vmatpush1.bf16.msra.mxu0 0
    %195 = vmatprep.subr.bf16.mxu0 0
    %196 = vmatpush1.bf16.msra.mxu0 0
    %197 = vmatprep.subr.bf16.mxu0 0
    %198 = vmatpush1.bf16.msra.mxu0 0
    %199 = vmatprep.subr.bf16.mxu0 0
    %200 = vmatpush1.bf16.msra.mxu0 0
    %201 = vmatprep.subr.bf16.mxu0 0
    %202 = vmatpush1.bf16.msra.mxu0 0
    %203 = vmatprep.mubr.bf16.mxu0 0
    %204 = vmatmul.mubr.bf16.gmra.mrb[0].mxu0 %v99
    %v205 = vpop.f32.mrb[0].mxu0
    %v206 = vadd.f32 %v121, %v205
    %v207 = vpop.f32.mrb[0].mxu0
    %v208 = vpop.f32.mrb[0].mxu0
    %v209 = vpop.f32.mrb[0].mxu0
    %210 = vdwg.mxu0
    %v211 = vmax.f32 %v206, 0.0
    %v212 = vld [vmem:[%s5] sm:$0x1]
    %v214 = vlaneseq
    %v215 = vshrl.u32 %v214, 7
    %v216 = vsub.s32 0, %v215
    %v217 = vrot.slane %v212, %v216
    %v219 = vmul.f32 %v211, %v217
    %vm220 = vcmask 523264
    %v221 = vsel %vm220, %v219, 0.0
    %222 = vadd.xlane.f32.xlu0 %v221
    %v223 = vpop.xlane.xlu0 %222
    %s224 = sld [smem:[#allocation2]]
    %v225 = vstv %s224
    %v226 = vadd.f32 %v223, %v225
    %v228 = vlaneseq
    %v229 = vand.u32 %v228, 127
    %v230 = vlaneseq
    %v231 = vshrl.u32 %v230, 7
    %v232 = vsub.s32 %v229, %v231
    %v233 = vrot.slane %v226, %v232
    %vm235 = vcmask 57344
    %236 = vst.msk [vmem:[#allocation3] sm:$0x1] %vm235, %v233
    // Predicated region
    $region30: #{tpu_custom_call.1} parent=1 // pred_check
      _
    $region31: #{tpu_custom_call.1} parent=1 // pred_check_branch
      %238 = sbr.rel (0) target = $region33
    $region32: #{tpu_custom_call.1} parent=1 // pred_region
      %s240 = ssub.s32 16, 16
      %241 = vsyncadd [#allocation4], %s240
      %s243 = sshll.u32 [#allocation3], 4
      %s244 = int_to_ptr.vmem [resolvable:$true] %s243
      %246 = dma.vmem_to_hbm [thread:$0]  %s244, 16, %s7, [#allocation4]
    $region33: #{tpu_custom_call.1} parent=1 // pred_fallthru
      _
    // Predicated region
    $region34: #{tpu_custom_call.1} parent=1 // pred_check
      _
    $region35: #{tpu_custom_call.1} parent=1 // pred_check_branch
      %248 = sbr.rel (0) target = $region37
    $region36: #{tpu_custom_call.1} parent=1 // pred_region
      %249 = dma.done [#allocation4], 16
    $region37: #{tpu_custom_call.1} parent=1 // pred_fallthru
      _
    %250 = vsyncpa [#allocation4], 1

</llo_original>
